<compile_context>
chip_gen: v5e
topology: v5e:2x2
jax: 0.10.0
libtpu: 0.0.40
codegen_flags: <defaults>
</compile_context>

<pallas_src>
import jax
import jax.numpy as jnp
from jax.experimental import pallas as pl
from jax.experimental.pallas import tpu as pltpu


def _round_up(x: int, m: int) -> int:
    return ((x + m - 1) // m) * m


def _choose_tile(batch: int, block_rows: int) -> int:
    """Lane-axis (batch) tile: multiple of 128, capped so the grid has >=2
    steps when the batch allows it (feeds both TensorCores on v7x)."""
    full = _round_up(max(batch, 1), 128)
    tm = min(_round_up(max(block_rows, 128), 128), full)
    if full >= 256:
        half = _round_up(-(-batch // 2), 128)   # ceil(batch/2), 128-aligned
        tm = min(tm, half)
    return tm


def _mlp_kernel(sT_ref, aT_ref, w1sT_ref, w1aT_ref, w2T_ref, c_ref, out_ref):
    """One batch tile of the reward MLP, feature-major layout.

    sT_ref:   (obs_dim, TM) bf16   state, batch on lanes
    aT_ref:   (act_dim, TM) bf16   action, batch on lanes
    w1sT_ref: (H, obs_dim)  bf16   resident
    w1aT_ref: (H, act_dim)  bf16   resident
    w2T_ref:  (H, H)        bf16   resident
    c_ref:    (4, H, 1)     f32    [0]=b1, [1]=b2, [2]=w3, [3][0,0]=b3
    out_ref:  (1, TM)       f32    lane-dense rewards
    """
    c = c_ref[...]                                   # (4, H, 1) f32
    b1 = c[0]                                        # (H, 1) lane-broadcast
    b2 = c[1]
    w3 = c[2]
    b3 = c[3, 0:1, :]                                # (1, 1)

    # Layer 1: split matmul (no concat anywhere).  MXU, f32 accumulation.
    h1 = (jnp.dot(w1sT_ref[...], sT_ref[...], preferred_element_type=jnp.float32)
          + jnp.dot(w1aT_ref[...], aT_ref[...], preferred_element_type=jnp.float32)
          + b1)
    h1 = jnp.maximum(h1, 0.0).astype(jnp.bfloat16)   # ReLU in f32, feed MXU bf16

    # Layer 2.
    h2 = jnp.dot(w2T_ref[...], h1, preferred_element_type=jnp.float32) + b2
    h2 = jnp.maximum(h2, 0.0)                        # (H, TM) f32

    # Layer 3 (H -> 1): sublane-weighted accumulate, lands lane-dense.
    out_ref[...] = jnp.sum(h2 * w3, axis=0, keepdims=True) + b3


def basic_reward_net_forward(state, action, next_state, done, packed_params,
                             *, block_rows: int = 8192):
    """BasicRewardNet forward (use_state=True, use_action=True,
    use_next_state=False, use_done=False)."""
    del next_state, done  # default BasicRewardNet flags exclude these inputs

    w1sT, w1aT, w2T, consts = packed_params
    B = state.shape[0]
    # torch.flatten(x, 1), then feature-major (transposed) + bf16 in one copy.
    sT = state.reshape(B, -1).astype(jnp.bfloat16).T     # (obs_dim, B)
    aT = action.reshape(B, -1).astype(jnp.bfloat16).T    # (act_dim, B)
    obs_dim, act_dim = sT.shape[0], aT.shape[0]
    hp = w2T.shape[0]
    assert w1sT.shape == (hp, obs_dim) and w1aT.shape == (hp, act_dim)
    assert consts.shape == (4, hp, 1)

    tm = _choose_tile(B, block_rows)
    grid = (pl.cdiv(B, tm),)   # ragged last block; tail lanes are discarded

    out = pl.pallas_call(
        _mlp_kernel,
        out_shape=jax.ShapeDtypeStruct((1, B), jnp.float32),
        grid=grid,
        in_specs=[
            pl.BlockSpec((obs_dim, tm), lambda i: (0, i)),    # state tile
            pl.BlockSpec((act_dim, tm), lambda i: (0, i)),    # action tile
            pl.BlockSpec((hp, obs_dim), lambda i: (0, 0)),    # W1_s^T (resident)
            pl.BlockSpec((hp, act_dim), lambda i: (0, 0)),    # W1_a^T (resident)
            pl.BlockSpec((hp, hp), lambda i: (0, 0)),         # W2^T   (resident)
            pl.BlockSpec((4, hp, 1), lambda i: (0, 0, 0)),    # consts (resident)
        ],
        out_specs=pl.BlockSpec((1, tm), lambda i: (0, i)),    # lane-dense rewards
        compiler_params=pltpu.CompilerParams(
            dimension_semantics=("parallel",),                # 2 TCs on v7x
        ),
    )(sT, aT, w1sT, w1aT, w2T, consts)

    rew = out[0]                      # squeeze_output=True in build_mlp -> (B,)
    assert rew.shape == state.shape[:1]
    return rew


def init_params(key, obs_dim, act_dim, hid=(32, 32), out_size=1):
    """PyTorch-Linear-style init; weights stored transposed as (in, out)."""
    in_size = obs_dim + act_dim
    sizes = (in_size,) + tuple(hid) + (out_size,)
    params = []
    for i in range(len(sizes) - 1):
        key, k_w, k_b = jax.random.split(key, 3)
        bound = float(sizes[i]) ** -0.5
        w = jax.random.uniform(k_w, (sizes[i], sizes[i + 1]),
                               minval=-bound, maxval=bound, dtype=jnp.float32)
        b = jax.random.uniform(k_b, (sizes[i + 1],),
                               minval=-bound, maxval=bound, dtype=jnp.float32)
        params += [w, b]
    return tuple(params)


def pack_params(params, obs_dim, act_dim):
    """One-time packing for the feature-major kernel: split W1 by input block,
    transpose all weights to (out, in), zero-pad hidden to a multiple of 8,
    cast matmul weights to bf16, and pack (b1, b2, w3, b3) into a single
    (4, H, 1) f32 consts array (padded units stay exactly 0 through ReLU and
    contribute 0 via w3's zero padding)."""
    w1, b1, w2, b2, w3, b3 = params
    h1, h2 = w1.shape[1], w2.shape[1]
    assert w1.shape[0] == obs_dim + act_dim
    hp = _round_up(max(h1, h2), 8)

    f32 = jnp.float32
    w1sT = jnp.zeros((hp, obs_dim), f32).at[:h1, :].set(w1[:obs_dim].T).astype(jnp.bfloat16)
    w1aT = jnp.zeros((hp, act_dim), f32).at[:h1, :].set(w1[obs_dim:].T).astype(jnp.bfloat16)
    w2T = jnp.zeros((hp, hp), f32).at[:h2, :h1].set(w2.T).astype(jnp.bfloat16)

    consts = jnp.zeros((4, hp, 1), f32)
    consts = consts.at[0, :h1, 0].set(b1)
    consts = consts.at[1, :h2, 0].set(b2)
    consts = consts.at[2, :h2, 0].set(w3[:, 0])
    consts = consts.at[3, 0, 0].set(b3[0])
    return w1sT, w1aT, w2T, consts


def reference_forward(state, action, params, emulate_bf16):
    """Pure-JAX reference; optionally emulates the kernel's bf16 operand math."""
    w1, b1, w2, b2, w3, b3 = params
    B = state.shape[0]
    x = jnp.concatenate([state.reshape(B, -1), action.reshape(B, -1)], axis=1)
    if emulate_bf16:
        x, w1m, w2m = x.astype(jnp.bfloat16), w1.astype(jnp.bfloat16), w2.astype(jnp.bfloat16)
    else:
        w1m, w2m = w1, w2
    h1 = jnp.maximum(jnp.dot(x, w1m, preferred_element_type=jnp.float32) + b1, 0.0)
    if emulate_bf16:
        h1 = h1.astype(jnp.bfloat16)
    h2 = jnp.maximum(jnp.dot(h1, w2m, preferred_element_type=jnp.float32) + b2, 0.0)
    return (jnp.dot(h2, w3) + b3)[:, 0]


if __name__ == "__main__":
    key = jax.random.PRNGKey(0)
    B, OBS_DIM, ACT_DIM = 8, 16, 4
    k_s, k_a, k_ns, k_p, k_s2, k_a2 = jax.random.split(key, 6)

    state = jax.random.normal(k_s, (B, OBS_DIM), dtype=jnp.float32)
    action = jax.random.normal(k_a, (B, ACT_DIM), dtype=jnp.float32)
    next_state = jax.random.normal(k_ns, (B, OBS_DIM), dtype=jnp.float32)  # unused (use_next_state=False)
    done = jnp.zeros((B,), dtype=jnp.float32)                              # unused (use_done=False)

    params = init_params(k_p, OBS_DIM, ACT_DIM)
    packed = pack_params(params, OBS_DIM, ACT_DIM)

    fwd = jax.jit(basic_reward_net_forward, static_argnames=("block_rows",))

    # Small demo batch (single grid step).
    rew = jax.block_until_ready(fwd(state, action, next_state, done, packed))
    assert rew.shape == state.shape[:1], rew.shape
    ref_b = reference_forward(state, action, params, emulate_bf16=True)
    ref_f = reference_forward(state, action, params, emulate_bf16=False)
    assert jnp.allclose(rew, ref_b, atol=1e-2), float(jnp.max(jnp.abs(rew - ref_b)))
    assert jnp.allclose(rew, ref_f, atol=5e-2), float(jnp.max(jnp.abs(rew - ref_f)))

    # Exercise the multi-step grid + ragged last block (no wrapper-side pad).
    B2 = 300
    state2 = jax.random.normal(k_s2, (B2, OBS_DIM), dtype=jnp.float32)
    action2 = jax.random.normal(k_a2, (B2, ACT_DIM), dtype=jnp.float32)
    done2 = jnp.zeros((B2,), dtype=jnp.float32)
    rew2 = jax.block_until_ready(
        fwd(state2, action2, state2, done2, packed, block_rows=128))
    assert rew2.shape == (B2,)
    ref2 = reference_forward(state2, action2, params, emulate_bf16=True)
    assert jnp.allclose(rew2, ref2, atol=1e-2), float(jnp.max(jnp.abs(rew2 - ref2)))

    print("KERNEL_OK")
</pallas_src>

<mosaic_0001>
module attributes {stable_mosaic.version = 11 : i64} {
  func.func @_mlp_kernel(%arg0: i32, %arg1: memref<16x128xbf16, #tpu.memory_space<vmem>>, %arg2: memref<4x128xbf16, #tpu.memory_space<vmem>>, %arg3: memref<32x16xbf16, #tpu.memory_space<vmem>>, %arg4: memref<32x4xbf16, #tpu.memory_space<vmem>>, %arg5: memref<32x32xbf16, #tpu.memory_space<vmem>>, %arg6: memref<4x32x1xf32, #tpu.memory_space<vmem>>, %arg7: memref<1x128xf32, #tpu.memory_space<vmem>>) attributes {dimension_semantics = [#tpu.dimension_semantics<parallel>], iteration_bounds = array<i64: 1>, scalar_prefetch = 0 : i64, scratch_operands = 0 : i64, tpu.core_type = #tpu.core_type<tc>, window_params = [{transform_indices = @transform_0, window_bounds = array<i64: 16, 128>}, {transform_indices = @transform_1, window_bounds = array<i64: 4, 128>}, {pipeline_mode = #tpu.pipeline_mode<synchronous>, transform_indices = @transform_2, window_bounds = array<i64: 32, 16>}, {pipeline_mode = #tpu.pipeline_mode<synchronous>, transform_indices = @transform_3, window_bounds = array<i64: 32, 4>}, {pipeline_mode = #tpu.pipeline_mode<synchronous>, transform_indices = @transform_4, window_bounds = array<i64: 32, 32>}, {pipeline_mode = #tpu.pipeline_mode<synchronous>, transform_indices = @transform_5, window_bounds = array<i64: 4, 32, 1>}, {transform_indices = @transform_6, window_bounds = array<i64: 1, 128>}]} {
    %c0 = arith.constant 0 : index
    %c0_0 = arith.constant 0 : index
    %c0_1 = arith.constant 0 : index
    %0 = vector.load %arg6[%c0, %c0_0, %c0_1] : memref<4x32x1xf32, #tpu.memory_space<vmem>>, vector<4x32x1xf32>
    %1 = vector.extract_strided_slice %0 {offsets = [0, 0, 0], sizes = [1, 32, 1], strides = [1, 1, 1]} : vector<4x32x1xf32> to vector<1x32x1xf32>
    %2 = vector.shape_cast %1 : vector<1x32x1xf32> to vector<32x1xf32>
    %3 = vector.extract_strided_slice %0 {offsets = [1, 0, 0], sizes = [1, 32, 1], strides = [1, 1, 1]} : vector<4x32x1xf32> to vector<1x32x1xf32>
    %4 = vector.shape_cast %3 : vector<1x32x1xf32> to vector<32x1xf32>
    %5 = vector.extract_strided_slice %0 {offsets = [2, 0, 0], sizes = [1, 32, 1], strides = [1, 1, 1]} : vector<4x32x1xf32> to vector<1x32x1xf32>
    %6 = vector.shape_cast %5 : vector<1x32x1xf32> to vector<32x1xf32>
    %7 = vector.extract_strided_slice %0 {offsets = [3, 0, 0], sizes = [1, 1, 1], strides = [1, 1, 1]} : vector<4x32x1xf32> to vector<1x1x1xf32>
    %8 = vector.shape_cast %7 : vector<1x1x1xf32> to vector<1x1xf32>
    %c0_2 = arith.constant 0 : index
    %c0_3 = arith.constant 0 : index
    %9 = vector.load %arg3[%c0_2, %c0_3] : memref<32x16xbf16, #tpu.memory_space<vmem>>, vector<32x16xbf16>
    %c0_4 = arith.constant 0 : index
    %c0_5 = arith.constant 0 : index
    %10 = vector.load %arg1[%c0_4, %c0_5] : memref<16x128xbf16, #tpu.memory_space<vmem>>, vector<16x128xbf16>
    %cst = arith.constant dense<0.000000e+00> : vector<32x128xf32>
    %11 = tpu.matmul %9, %10, %cst {dimension_numbers = #tpu.dot_dimension_numbers<[1], [0], [0], [1], [0, 0, 1, 1], [], []>} : vector<32x16xbf16>, vector<16x128xbf16>, vector<32x128xf32> -> vector<32x128xf32>
    %c0_6 = arith.constant 0 : index
    %c0_7 = arith.constant 0 : index
    %12 = vector.load %arg4[%c0_6, %c0_7] : memref<32x4xbf16, #tpu.memory_space<vmem>>, vector<32x4xbf16>
    %c0_8 = arith.constant 0 : index
    %c0_9 = arith.constant 0 : index
    %13 = vector.load %arg2[%c0_8, %c0_9] : memref<4x128xbf16, #tpu.memory_space<vmem>>, vector<4x128xbf16>
    %cst_10 = arith.constant dense<0.000000e+00> : vector<32x128xf32>
    %14 = tpu.matmul %12, %13, %cst_10 {dimension_numbers = #tpu.dot_dimension_numbers<[1], [0], [0], [1], [0, 0, 1, 1], [], []>} : vector<32x4xbf16>, vector<4x128xbf16>, vector<32x128xf32> -> vector<32x128xf32>
    %15 = arith.addf %11, %14 : vector<32x128xf32>
    %16 = vector.broadcast %2 : vector<32x1xf32> to vector<32x128xf32>
    %17 = arith.addf %15, %16 : vector<32x128xf32>
    %cst_11 = arith.constant 0.000000e+00 : f32
    %18 = vector.broadcast %cst_11 : f32 to vector<32x128xf32>
    %19 = arith.maximumf %17, %18 : vector<32x128xf32>
    %20 = arith.truncf %19 : vector<32x128xf32> to vector<32x128xbf16>
    %c0_12 = arith.constant 0 : index
    %c0_13 = arith.constant 0 : index
    %21 = vector.load %arg5[%c0_12, %c0_13] : memref<32x32xbf16, #tpu.memory_space<vmem>>, vector<32x32xbf16>
    %cst_14 = arith.constant dense<0.000000e+00> : vector<32x128xf32>
    %22 = tpu.matmul %21, %20, %cst_14 {dimension_numbers = #tpu.dot_dimension_numbers<[1], [0], [0], [1], [0, 0, 1, 1], [], []>} : vector<32x32xbf16>, vector<32x128xbf16>, vector<32x128xf32> -> vector<32x128xf32>
    %23 = vector.broadcast %4 : vector<32x1xf32> to vector<32x128xf32>
    %24 = arith.addf %22, %23 : vector<32x128xf32>
    %cst_15 = arith.constant 0.000000e+00 : f32
    %25 = vector.broadcast %cst_15 : f32 to vector<32x128xf32>
    %26 = arith.maximumf %24, %25 : vector<32x128xf32>
    %27 = vector.broadcast %6 : vector<32x1xf32> to vector<32x128xf32>
    %28 = arith.mulf %26, %27 : vector<32x128xf32>
    %cst_16 = arith.constant dense<0.000000e+00> : vector<128xf32>
    %29 = vector.multi_reduction <add>, %28, %cst_16 [0] : vector<32x128xf32> to vector<128xf32>
    %30 = vector.shape_cast %29 : vector<128xf32> to vector<1x128xf32>
    %31 = vector.broadcast %8 : vector<1x1xf32> to vector<1x128xf32>
    %32 = arith.addf %30, %31 : vector<1x128xf32>
    %c0_17 = arith.constant 0 : index
    %c0_18 = arith.constant 0 : index
    %33 = vector.load %arg7[%c0_17, %c0_18] : memref<1x128xf32, #tpu.memory_space<vmem>>, vector<1x128xf32>
    tpu.vector_store %arg7[%c0_17, %c0_18], %32 {strides = array<i32>} : memref<1x128xf32, #tpu.memory_space<vmem>>, vector<1x128xf32>,
    return
  }
  func.func @transform_0(%arg0: i32) -> (i32, i32) {
    %c0_i32 = arith.constant 0 : i32
    %c0_i32_0 = arith.constant 0 : i32
    return %c0_i32, %arg0 : i32, i32
  }
  func.func @transform_1(%arg0: i32) -> (i32, i32) {
    %c0_i32 = arith.constant 0 : i32
    %c0_i32_0 = arith.constant 0 : i32
    return %c0_i32, %arg0 : i32, i32
  }
  func.func @transform_2(%arg0: i32) -> (i32, i32) {
    %c0_i32 = arith.constant 0 : i32
    %c0_i32_0 = arith.constant 0 : i32
    %c0_i32_1 = arith.constant 0 : i32
    return %c0_i32, %c0_i32_0 : i32, i32
  }
  func.func @transform_3(%arg0: i32) -> (i32, i32) {
    %c0_i32 = arith.constant 0 : i32
    %c0_i32_0 = arith.constant 0 : i32
    %c0_i32_1 = arith.constant 0 : i32
    return %c0_i32, %c0_i32_0 : i32, i32
  }
  func.func @transform_4(%arg0: i32) -> (i32, i32) {
    %c0_i32 = arith.constant 0 : i32
    %c0_i32_0 = arith.constant 0 : i32
    %c0_i32_1 = arith.constant 0 : i32
    return %c0_i32, %c0_i32_0 : i32, i32
  }
  func.func @transform_5(%arg0: i32) -> (i32, i32, i32) {
    %c0_i32 = arith.constant 0 : i32
    %c0_i32_0 = arith.constant 0 : i32
    %c0_i32_1 = arith.constant 0 : i32
    %c0_i32_2 = arith.constant 0 : i32
    return %c0_i32, %c0_i32_0, %c0_i32_1 : i32, i32, i32
  }
  func.func @transform_6(%arg0: i32) -> (i32, i32) {
    %c0_i32 = arith.constant 0 : i32
    %c0_i32_0 = arith.constant 0 : i32
    return %c0_i32, %arg0 : i32, i32
  }
}

</mosaic_0001>

<llo_original>
// kernel: basic_reward_net_forward.1
$region0: #{basic_reward_net_forward.1}
  #allocation0 [shape = 'u32[]', space=smem, size = 0x4, offset = 0x4, fixed_abs, tag = 'smem constant byte address 0x4 - core index']
  #allocation1 [shape = 'u32[72,128]{1,0:T(1,128)}', space=vmem, size = 0x9000, scoped, tag = 'internal scratch']
  %s0 = inlined_call_operand.vmem [shape: bf16[16,8], index: 0, kind: input, shape index: {}]
  %s1 = inlined_call_operand.vmem [shape: bf16[4,8], index: 1, kind: input, shape index: {}]
  %s2 = inlined_call_operand.vmem [shape: bf16[32,16], index: 2, kind: input, shape index: {}]
  %s3 = inlined_call_operand.vmem [shape: bf16[32,4], index: 3, kind: input, shape index: {}]
  %s4 = inlined_call_operand.vmem [shape: bf16[32,32], index: 4, kind: input, shape index: {}]
  %s5 = inlined_call_operand.vmem [shape: f32[4,32,1], index: 5, kind: input, shape index: {}]
  %s6 = inlined_call_operand.hbm [shape: f32[1,8], index: 6, kind: output, shape index: {}]
  %s7 = sld [smem:[#allocation0]]
  $region34: #{basic_reward_net_forward.1} parent=0
    _
  %s9 = ssub.s32 1, %s7
  %s10 = scalar_select 0, %s9, %s7
  $region1: #{basic_reward_net_forward.1} parent=0
    #allocation2 [shape = 'u8[512]{0}', space=vmem, size = 0x400, scoped, tag = 'output window, operand 0, single buffered']
    #allocation3 [shape = 's32[1]{0}', space=sflag, size = 0x4, scoped, tag = 'scoped memory for basic_reward_net_forward.1']
    %11 = vsyncpa [#allocation3], 0
    // Predicated region
    $region2: #{basic_reward_net_forward.1} parent=1 // pred_check
      _
    $region3: #{basic_reward_net_forward.1} parent=1 // pred_check_branch
      %13 = sbr.rel (0) target = $region5
    $region4: #{basic_reward_net_forward.1} parent=1 // pred_region
      _
    $region5: #{basic_reward_net_forward.1} parent=1 // pred_fallthru
      _
    // Predicated region
    $region6: #{basic_reward_net_forward.1} parent=1 // pred_check
      _
    $region7: #{basic_reward_net_forward.1} parent=1 // pred_check_branch
      %15 = sbr.rel (0) target = $region9
    $region8: #{basic_reward_net_forward.1} parent=1 // pred_region
      _
    $region9: #{basic_reward_net_forward.1} parent=1 // pred_fallthru
      _
    // Predicated region
    $region10: #{basic_reward_net_forward.1} parent=1 // pred_check
      _
    $region11: #{basic_reward_net_forward.1} parent=1 // pred_check_branch
      %17 = sbr.rel (0) target = $region13
    $region12: #{basic_reward_net_forward.1} parent=1 // pred_region
      _
    $region13: #{basic_reward_net_forward.1} parent=1 // pred_fallthru
      _
    // Predicated region
    $region14: #{basic_reward_net_forward.1} parent=1 // pred_check
      _
    $region15: #{basic_reward_net_forward.1} parent=1 // pred_check_branch
      %19 = sbr.rel (0) target = $region17
    $region16: #{basic_reward_net_forward.1} parent=1 // pred_region
      _
    $region17: #{basic_reward_net_forward.1} parent=1 // pred_fallthru
      _
    // Predicated region
    $region18: #{basic_reward_net_forward.1} parent=1 // pred_check
      _
    $region19: #{basic_reward_net_forward.1} parent=1 // pred_check_branch
      %21 = sbr.rel (0) target = $region21
    $region20: #{basic_reward_net_forward.1} parent=1 // pred_region
      _
    $region21: #{basic_reward_net_forward.1} parent=1 // pred_fallthru
      _
    // Predicated region
    $region22: #{basic_reward_net_forward.1} parent=1 // pred_check
      _
    $region23: #{basic_reward_net_forward.1} parent=1 // pred_check_branch
      %23 = sbr.rel (0) target = $region25
    $region24: #{basic_reward_net_forward.1} parent=1 // pred_region
      _
    $region25: #{basic_reward_net_forward.1} parent=1 // pred_fallthru
      _
    %v25 = vld [vmem:[%s5] sm:$0xff]
    %v26 = vld [vmem:[%s5 + $0x8] sm:$0xff]
    %v27 = vld [vmem:[%s5 + $0x10] sm:$0xff]
    %v28 = vld [vmem:[%s5 + $0x18] sm:$0xff]
    %v29 = vld [vmem:[%s5 + $0x20] sm:$0xff]
    %v30 = vld [vmem:[%s5 + $0x28] sm:$0xff]
    %v31 = vld [vmem:[%s5 + $0x30] sm:$0xff]
    %v32 = vld [vmem:[%s5 + $0x38] sm:$0xff]
    %v33 = vld [vmem:[%s5 + $0x40] sm:$0xff]
    %v34 = vld [vmem:[%s5 + $0x48] sm:$0xff]
    %v35 = vld [vmem:[%s5 + $0x50] sm:$0xff]
    %v36 = vld [vmem:[%s5 + $0x58] sm:$0xff]
    %v37 = vld [vmem:[%s5 + $0x60] sm:$0xff]
    %v38 = vld [vmem:[%s2] sm:$0xf]
    %v39 = vld [vmem:[%s2 + $0x4] sm:$0xf]
    %v40 = vld [vmem:[%s2 + $0x8] sm:$0xf]
    %v41 = vld [vmem:[%s2 + $0xc] sm:$0xf]
    %v42 = vld [vmem:[%s0] sm:$0xf]
    %v43 = vld [vmem:[%s0 + $0x4] sm:$0xf]
    %v44 = vld [vmem:[%s3] sm:$0xf]
    %v45 = vld [vmem:[%s3 + $0x4] sm:$0xf]
    %v46 = vld [vmem:[%s3 + $0x8] sm:$0xf]
    %v47 = vld [vmem:[%s3 + $0xc] sm:$0xf]
    %v48 = vld [vmem:[%s1] sm:$0x3]
    %v53 = vunpack.c.l.b16 %v44
    %v54 = vunpack.c.l.b16 %v45
    %v55 = vunpack.c.l.b16 %v46
    %v56 = vunpack.c.l.b16 %v47
    %v57 = vpack.c.b16 %v54, %v53
    %v58 = vpack.c.b16 %v56, %v55
    %vm59 = vcmask 31744
    %v61 = vsel %vm59, %v57, 0
    %v64 = vsel %vm59, %v58, 0
    %vm66 = vcmask 1041408
    %v68 = vsel %vm66, %v48, 0
    %70 = vmatpush.bf16.msra.mxu0 0
    %71 = vmatpush.bf16.msra.mxu0 0
    %72 = vmatpush.bf16.msra.mxu0 0
    %73 = vmatpush.bf16.msra.mxu0 0
    %74 = vmatpush.bf16.msra.mxu0 0
    %75 = vmatpush.bf16.msra.mxu0 0
    %76 = vmatpush.bf16.msra.mxu0 0
    %77 = vmatpush.bf16.msra.mxu0 %v68
    %78 = vmatmul.bf16.gmra.mxu0 %v61
    %v79 = vpop.f32.mrf.mxu0
    %v80 = vadd.f32 0.0, %v79
    %v81 = vpop.f32.mrf.mxu0
    %v82 = vadd.f32 0.0, %v81
    %83 = vmatmul.bf16.gmra.mxu0 %v64
    %v84 = vpop.f32.mrf.mxu0
    %v85 = vadd.f32 0.0, %v84
    %v86 = vpop.f32.mrf.mxu0
    %v87 = vadd.f32 0.0, %v86
    %88 = vdwg.mxu0
    %v93 = vunpack.c.l.b16 %v38
    %v94 = vunpack.c.l.b16 %v39
    %v95 = vunpack.c.l.b16 %v40
    %v96 = vunpack.c.l.b16 %v41
    %v97 = vpack.c.b16 %v94, %v93
    %v98 = vpack.c.b16 %v96, %v95
    %v101 = vunpack.c.l.b16 %v42
    %v102 = vunpack.c.l.b16 %v43
    %v103 = vpack.c.b16 %v102, %v101
    %vm105 = vcmask 130048
    %v107 = vsel %vm105, %v97, 0
    %v110 = vsel %vm105, %v98, 0
    %112 = vmatpush.bf16.msra.mxu0 0
    %113 = vmatpush.bf16.msra.mxu0 0
    %114 = vmatpush.bf16.msra.mxu0 0
    %115 = vmatpush.bf16.msra.mxu0 0
    %116 = vmatpush.bf16.msra.mxu0 0
    %117 = vmatpush.bf16.msra.mxu0 0
    %118 = vmatpush.bf16.msra.mxu0 0
    %119 = vmatpush.bf16.msra.mxu0 %v103
    %120 = vmatmul.bf16.gmra.mxu0 %v107
    %v121 = vpop.f32.mrf.mxu0
    %v122 = vadd.f32 %v80, %v121
    %v123 = vpop.f32.mrf.mxu0
    %v124 = vadd.f32 %v82, %v123
    %125 = vmatmul.bf16.gmra.mxu0 %v110
    %v126 = vpop.f32.mrf.mxu0
    %v127 = vadd.f32 %v85, %v126
    %v128 = vpop.f32.mrf.mxu0
    %v129 = vadd.f32 %v87, %v128
    %130 = vdwg.mxu0
    %132 = vset.pattern.permute.xlu0 0
    %133 = vperm.xlu0 %132, %v25
    %v134 = vpop.permute.xlu0 %133
    %137 = vset.pattern.permute.xlu0 0
    %138 = vperm.xlu0 %137, %v26
    %v139 = vpop.permute.xlu0 %138
    %142 = vset.pattern.permute.xlu0 0
    %143 = vperm.xlu0 %142, %v27
    %v144 = vpop.permute.xlu0 %143
    %147 = vset.pattern.permute.xlu0 0
    %148 = vperm.xlu0 %147, %v28
    %v149 = vpop.permute.xlu0 %148
    %v151 = vadd.f32 %v122, %v134
    %v152 = vadd.f32 %v124, %v139
    %v153 = vadd.f32 %v127, %v144
    %v154 = vadd.f32 %v129, %v149
    %v155 = vmax.f32 %v151, 0.0
    %v156 = vmax.f32 %v152, 0.0
    %v157 = vmax.f32 %v153, 0.0
    %v158 = vmax.f32 %v154, 0.0
    %v159 = vpack.c.bf16 %v156, %v155
    %v160 = vpack.c.bf16 %v158, %v157
    %v161 = vld [vmem:[%s4] sm:$0xf]
    %v162 = vld [vmem:[%s4 + $0x4] sm:$0xf]
    %v163 = vld [vmem:[%s4 + $0x8] sm:$0xf]
    %v164 = vld [vmem:[%s4 + $0xc] sm:$0xf]
    %166 = vset.pattern.permute.xlu0 0
    %167 = vperm.xlu0 %166, %v29
    %v168 = vpop.permute.xlu0 %167
    %171 = vset.pattern.permute.xlu0 0
    %172 = vperm.xlu0 %171, %v30
    %v173 = vpop.permute.xlu0 %172
    %176 = vset.pattern.permute.xlu0 0
    %177 = vperm.xlu0 %176, %v31
    %v178 = vpop.permute.xlu0 %177
    %181 = vset.pattern.permute.xlu0 0
    %182 = vperm.xlu0 %181, %v32
    %v183 = vpop.permute.xlu0 %182
    %v189 = vunpack.c.l.b16 %v161
    %v190 = vunpack.c.l.b16 %v162
    %v191 = vunpack.c.l.b16 %v163
    %v192 = vunpack.c.l.b16 %v164
    %v193 = vpack.c.b16 %v190, %v189
    %v194 = vpack.c.b16 %v192, %v191
    %vm195 = vcmask 261120
    %v197 = vsel %vm195, %v193, 0
    %v200 = vsel %vm195, %v194, 0
    %202 = vmatpush.bf16.msra.mxu0 0
    %203 = vmatpush.bf16.msra.mxu0 0
    %204 = vmatpush.bf16.msra.mxu0 0
    %205 = vmatpush.bf16.msra.mxu0 0
    %206 = vmatpush.bf16.msra.mxu0 0
    %207 = vmatpush.bf16.msra.mxu0 0
    %208 = vmatpush.bf16.msra.mxu0 %v160
    %209 = vmatpush.bf16.msra.mxu0 %v159
    %210 = vmatmul.bf16.gmra.mxu0 %v197
    %v211 = vpop.f32.mrf.mxu0
    %v212 = vadd.f32 %v168, %v211
    %v213 = vpop.f32.mrf.mxu0
    %v214 = vadd.f32 %v173, %v213
    %215 = vmatmul.bf16.gmra.mxu0 %v200
    %v216 = vpop.f32.mrf.mxu0
    %v217 = vadd.f32 %v178, %v216
    %v218 = vpop.f32.mrf.mxu0
    %v219 = vadd.f32 %v183, %v218
    %220 = vdwg.mxu0
    %v221 = vmax.f32 %v212, 0.0
    %v222 = vmax.f32 %v214, 0.0
    %v223 = vmax.f32 %v217, 0.0
    %v224 = vmax.f32 %v219, 0.0
    %226 = vset.pattern.permute.xlu0 0
    %227 = vperm.xlu0 %226, %v33
    %v228 = vpop.permute.xlu0 %227
    %231 = vset.pattern.permute.xlu0 0
    %232 = vperm.xlu0 %231, %v34
    %v233 = vpop.permute.xlu0 %232
    %236 = vset.pattern.permute.xlu0 0
    %237 = vperm.xlu0 %236, %v35
    %v238 = vpop.permute.xlu0 %237
    %241 = vset.pattern.permute.xlu0 0
    %242 = vperm.xlu0 %241, %v36
    %v243 = vpop.permute.xlu0 %242
    %v245 = vmul.f32 %v221, %v228
    %v246 = vmul.f32 %v222, %v233
    %v247 = vmul.f32 %v223, %v238
    %v248 = vmul.f32 %v224, %v243
    %v249 = vadd.f32 %v245, %v246
    %v250 = vadd.f32 %v249, %v247
    %v251 = vadd.f32 %v250, %v248
    %v252 = vrot.slane %v251, 4
    %v253 = vadd.f32 %v251, %v252
    %v254 = vrot.slane %v253, 2
    %v255 = vadd.f32 %v253, %v254
    %v256 = vrot.slane %v255, 1
    %v257 = vadd.f32 %v255, %v256
    %259 = vset.pattern.permute.xlu0 0
    %260 = vperm.xlu0 %259, %v37
    %v261 = vpop.permute.xlu0 %260
    %v263 = vadd.f32 %v257, %v261
    %264 = vst [vmem:[#allocation2] sm:$0x1] %v263
    // Predicated region
    $region26: #{basic_reward_net_forward.1} parent=1 // pred_check
      _
    $region27: #{basic_reward_net_forward.1} parent=1 // pred_check_branch
      %266 = sbr.rel (0) target = $region29
    $region28: #{basic_reward_net_forward.1} parent=1 // pred_region
      %268 = vsyncadd [#allocation3], 0
      %s270 = sshll.u32 [#allocation2], 4
      %s271 = int_to_ptr.vmem [resolvable:$true] %s270
      %s272 = sshll.u32 %s6, 4
      %s273 = int_to_ptr.hbm [resolvable:$true] %s272
      %275 = dma.vmem_to_hbm [thread:$0]  %s271, 16, %s273, [#allocation3]
    $region29: #{basic_reward_net_forward.1} parent=1 // pred_fallthru
      _
    // Predicated region
    $region30: #{basic_reward_net_forward.1} parent=1 // pred_check
      _
    $region31: #{basic_reward_net_forward.1} parent=1 // pred_check_branch
      %277 = sbr.rel (0) target = $region33
    $region32: #{basic_reward_net_forward.1} parent=1 // pred_region
      %279 = dma.done [#allocation3], 16
    $region33: #{basic_reward_net_forward.1} parent=1 // pred_fallthru
      _
    %280 = vsyncpa [#allocation3], 1

</llo_original>
